<compile_context>
chip_gen: v6e
topology: v6e:2x2x1
jax: 0.10.0
libtpu: 0.0.40
codegen_flags: <defaults>
</compile_context>

<pallas_src>
import jax
import jax.numpy as jnp
from jax.experimental import pallas as pl
from jax.experimental.pallas import tpu as pltpu

LANE = 128  # vreg lane width; the hidden dim is padded to a multiple of this


def _round_up(x, m):
    return ((x + m - 1) // m) * m


def value_net_kernel(x_ref, w1_ref, b1_ref, w2_ref, b2_ref, w3_ref, b3_ref, out_ref):
    # bf16 operands on the MXU, f32 accumulation; elementwise (bias, ReLU) in f32.
    x = x_ref[...].astype(jnp.bfloat16)

    h1 = jnp.dot(x, w1_ref[...], preferred_element_type=jnp.float32) + b1_ref[...]
    h1 = jnp.maximum(h1, 0.0).astype(jnp.bfloat16)

    h2 = jnp.dot(h1, w2_ref[...], preferred_element_type=jnp.float32) + b2_ref[...]
    h2 = jnp.maximum(h2, 0.0)  # keep f32 for the VPU value head

    # Value head: VPU multiply + cross-lane reduce instead of a padded 128-wide matmul.
    # w3_ref is (1, hidden_p) f32; padded hidden columns are zero so they don't contribute.
    v = jnp.sum(h2 * w3_ref[...], axis=-1, keepdims=True) + b3_ref[...]
    out_ref[...] = v.astype(out_ref.dtype)


def prepare_params(torch_params):
    """One-time conversion of PyTorch-shaped params to kernel layout.

    PyTorch nn.Linear: weight (out, in), bias (out,).
    Kernel layout:
      w1: (obs_dim, hidden_p) bf16   b1: (1, hidden_p) f32
      w2: (hidden_p, hidden_p) bf16  b2: (1, hidden_p) f32
      w3: (1, hidden_p) f32 (head row)  b3: (1, 1) f32
    Call once at parameter-load time, NOT per forward call.
    """
    def pad_w_bf16(w_t, rows, cols):  # w_t already transposed to (in, out)
        buf = jnp.zeros((rows, cols), jnp.bfloat16)
        return buf.at[: w_t.shape[0], : w_t.shape[1]].set(w_t.astype(jnp.bfloat16))

    def pad_row_f32(b, cols):
        buf = jnp.zeros((1, cols), jnp.float32)
        return buf.at[0, : b.shape[0]].set(b.astype(jnp.float32))

    hidden, obs_dim = torch_params["fc1_w"].shape
    hidden_p = _round_up(hidden, LANE)

    return {
        "w1": pad_w_bf16(torch_params["fc1_w"].T, obs_dim, hidden_p),
        "b1": pad_row_f32(torch_params["fc1_b"], hidden_p),
        "w2": pad_w_bf16(torch_params["fc2_w"].T, hidden_p, hidden_p),
        "b2": pad_row_f32(torch_params["fc2_b"], hidden_p),
        "w3": pad_row_f32(torch_params["head_w"][0], hidden_p),   # head row, f32
        "b3": torch_params["head_b"].astype(jnp.float32).reshape(1, 1),
    }


def value_network_forward(obs, kp, *, block_b=1024):
    """obs: (B, obs_dim) f32. kp: output of prepare_params. Returns (B, 1) f32."""
    B, obs_dim = obs.shape
    hidden_p = kp["w1"].shape[1]

    # Batch tile: multiple of 8 sublanes, up to block_b rows per grid step.
    TB = min(block_b, _round_up(B, 8))
    B_pad = _round_up(B, TB)
    # v7x has 2 TensorCores: keep >= 2 grid steps when there is enough batch to split,
    # otherwise one core idles and a free 2x is lost.
    if B_pad // TB < 2 and B_pad >= 16:
        TB = _round_up((B_pad + 1) // 2, 8)
        B_pad = _round_up(B, TB)
    if B_pad != B:
        obs = jnp.pad(obs, ((0, B_pad - B), (0, 0)))

    # VMEM budget: resident weights/biases + double-buffered obs/out blocks + activations.
    w_bytes = (kp["w1"].size + kp["w2"].size) * 2                        # bf16 matmul weights
    b_bytes = (kp["b1"].size + kp["b2"].size + kp["w3"].size + kp["b3"].size) * 4
    io_bytes = 2 * (TB * obs_dim * 4 + TB * 1 * 4)                       # 2x buffered in/out blocks
    act_bytes = TB * hidden_p * (4 + 2 + 4)                              # h1 f32/bf16 + h2 f32
    vmem_limit = int(max(2 * (w_bytes + b_bytes + io_bytes + act_bytes), 8 << 20))
    vmem_limit = min(vmem_limit, 48 << 20)                               # respect v7x's 64 MiB VMEM

    out = pl.pallas_call(
        value_net_kernel,
        out_shape=jax.ShapeDtypeStruct((B_pad, 1), jnp.float32),
        grid=(B_pad // TB,),
        in_specs=[
            pl.BlockSpec((TB, obs_dim), lambda i: (i, 0)),          # obs tile, pipelined
            pl.BlockSpec((obs_dim, hidden_p), lambda i: (0, 0)),    # w1 (VMEM-resident)
            pl.BlockSpec((1, hidden_p), lambda i: (0, 0)),          # b1
            pl.BlockSpec((hidden_p, hidden_p), lambda i: (0, 0)),   # w2
            pl.BlockSpec((1, hidden_p), lambda i: (0, 0)),          # b2
            pl.BlockSpec((1, hidden_p), lambda i: (0, 0)),          # w3 head row (f32)
            pl.BlockSpec((1, 1), lambda i: (0, 0)),                 # b3 scalar
        ],
        out_specs=pl.BlockSpec((TB, 1), lambda i: (i, 0)),          # 1-wide value column
        compiler_params=pltpu.CompilerParams(
            dimension_semantics=("parallel",),   # shards batch across TCs on v7x
            vmem_limit_bytes=vmem_limit,
        ),
    )(obs, kp["w1"], kp["b1"], kp["w2"], kp["b2"], kp["w3"], kp["b3"])

    return out[:B]


def init_params(key, obs_dim, hidden_dim):
    """Deterministic synthetic params in PyTorch nn.Linear shapes."""
    ks = jax.random.split(key, 6)
    s1 = 1.0 / jnp.sqrt(obs_dim)
    s2 = 1.0 / jnp.sqrt(hidden_dim)
    return {
        "fc1_w": jax.random.uniform(ks[0], (hidden_dim, obs_dim), jnp.float32, -s1, s1),
        "fc1_b": jax.random.uniform(ks[1], (hidden_dim,), jnp.float32, -s1, s1),
        "fc2_w": jax.random.uniform(ks[2], (hidden_dim, hidden_dim), jnp.float32, -s2, s2),
        "fc2_b": jax.random.uniform(ks[3], (hidden_dim,), jnp.float32, -s2, s2),
        "head_w": jax.random.uniform(ks[4], (1, hidden_dim), jnp.float32, -s2, s2),
        "head_b": jax.random.uniform(ks[5], (1,), jnp.float32, -s2, s2),
    }


def reference_forward(obs, params):
    h1 = jnp.maximum(obs @ params["fc1_w"].T + params["fc1_b"], 0.0)
    h2 = jnp.maximum(h1 @ params["fc2_w"].T + params["fc2_b"], 0.0)
    return h2 @ params["head_w"].T + params["head_b"]


if __name__ == "__main__":
    key = jax.random.PRNGKey(0)
    k_obs, k_obs2, k_par = jax.random.split(key, 3)

    B, OBS_DIM, HIDDEN_DIM = 4, 12, 32
    params = init_params(k_par, OBS_DIM, HIDDEN_DIM)
    kernel_params = prepare_params(params)  # one-time transpose / pad / bf16 cast

    # Small batch (single grid step)
    obs = jax.random.normal(k_obs, (B, OBS_DIM), dtype=jnp.float32)
    out = jax.block_until_ready(value_network_forward(obs, kernel_params))
    ref = reference_forward(obs, params)
    assert out.shape == (B, 1)
    assert jnp.allclose(out, ref, atol=2e-2, rtol=2e-2), "mismatch vs reference (small batch)"

    # Larger batch (exercises multi-step batch grid, >=2 steps for v7x, padding path)
    B2 = 1000
    obs2 = jax.random.normal(k_obs2, (B2, OBS_DIM), dtype=jnp.float32)
    out2 = jax.block_until_ready(value_network_forward(obs2, kernel_params))
    ref2 = reference_forward(obs2, params)
    assert out2.shape == (B2, 1)
    assert jnp.allclose(out2, ref2, atol=2e-2, rtol=2e-2), "mismatch vs reference (large batch)"

    print("KERNEL_OK")
</pallas_src>

<mosaic_0001>
module attributes {stable_mosaic.version = 11 : i64} {
  func.func @value_net_kernel(%arg0: i32, %arg1: memref<8x12xf32, #tpu.memory_space<vmem>>, %arg2: memref<12x128xbf16, #tpu.memory_space<vmem>>, %arg3: memref<1x128xf32, #tpu.memory_space<vmem>>, %arg4: memref<128x128xbf16, #tpu.memory_space<vmem>>, %arg5: memref<1x128xf32, #tpu.memory_space<vmem>>, %arg6: memref<1x128xf32, #tpu.memory_space<vmem>>, %arg7: memref<1x1xf32, #tpu.memory_space<vmem>>, %arg8: memref<8x1xf32, #tpu.memory_space<vmem>>) attributes {dimension_semantics = [#tpu.dimension_semantics<parallel>], iteration_bounds = array<i64: 1>, scalar_prefetch = 0 : i64, scratch_operands = 0 : i64, tpu.core_type = #tpu.core_type<tc>, window_params = [{transform_indices = @transform_0, window_bounds = array<i64: 8, 12>}, {pipeline_mode = #tpu.pipeline_mode<synchronous>, transform_indices = @transform_1, window_bounds = array<i64: 12, 128>}, {pipeline_mode = #tpu.pipeline_mode<synchronous>, transform_indices = @transform_2, window_bounds = array<i64: 1, 128>}, {pipeline_mode = #tpu.pipeline_mode<synchronous>, transform_indices = @transform_3, window_bounds = array<i64: 128, 128>}, {pipeline_mode = #tpu.pipeline_mode<synchronous>, transform_indices = @transform_4, window_bounds = array<i64: 1, 128>}, {pipeline_mode = #tpu.pipeline_mode<synchronous>, transform_indices = @transform_5, window_bounds = array<i64: 1, 128>}, {pipeline_mode = #tpu.pipeline_mode<synchronous>, transform_indices = @transform_6, window_bounds = array<i64: 1, 1>}, {transform_indices = @transform_7, window_bounds = array<i64: 8, 1>}]} {
    %c0 = arith.constant 0 : index
    %c0_0 = arith.constant 0 : index
    %0 = vector.load %arg1[%c0, %c0_0] : memref<8x12xf32, #tpu.memory_space<vmem>>, vector<8x12xf32>
    %1 = arith.truncf %0 : vector<8x12xf32> to vector<8x12xbf16>
    %c0_1 = arith.constant 0 : index
    %c0_2 = arith.constant 0 : index
    %2 = vector.load %arg2[%c0_1, %c0_2] : memref<12x128xbf16, #tpu.memory_space<vmem>>, vector<12x128xbf16>
    %cst = arith.constant dense<0.000000e+00> : vector<8x128xf32>
    %3 = tpu.matmul %1, %2, %cst {dimension_numbers = #tpu.dot_dimension_numbers<[1], [0], [0], [1], [0, 0, 1, 1], [], []>} : vector<8x12xbf16>, vector<12x128xbf16>, vector<8x128xf32> -> vector<8x128xf32>
    %c0_3 = arith.constant 0 : index
    %c0_4 = arith.constant 0 : index
    %4 = vector.load %arg3[%c0_3, %c0_4] : memref<1x128xf32, #tpu.memory_space<vmem>>, vector<1x128xf32>
    %5 = vector.broadcast %4 : vector<1x128xf32> to vector<8x128xf32>
    %6 = arith.addf %3, %5 : vector<8x128xf32>
    %cst_5 = arith.constant 0.000000e+00 : f32
    %7 = vector.broadcast %cst_5 : f32 to vector<8x128xf32>
    %8 = arith.maximumf %6, %7 : vector<8x128xf32>
    %9 = arith.truncf %8 : vector<8x128xf32> to vector<8x128xbf16>
    %c0_6 = arith.constant 0 : index
    %c0_7 = arith.constant 0 : index
    %10 = vector.load %arg4[%c0_6, %c0_7] : memref<128x128xbf16, #tpu.memory_space<vmem>>, vector<128x128xbf16>
    %cst_8 = arith.constant dense<0.000000e+00> : vector<8x128xf32>
    %11 = tpu.matmul %9, %10, %cst_8 {dimension_numbers = #tpu.dot_dimension_numbers<[1], [0], [0], [1], [0, 0, 1, 1], [], []>} : vector<8x128xbf16>, vector<128x128xbf16>, vector<8x128xf32> -> vector<8x128xf32>
    %c0_9 = arith.constant 0 : index
    %c0_10 = arith.constant 0 : index
    %12 = vector.load %arg5[%c0_9, %c0_10] : memref<1x128xf32, #tpu.memory_space<vmem>>, vector<1x128xf32>
    %13 = vector.broadcast %12 : vector<1x128xf32> to vector<8x128xf32>
    %14 = arith.addf %11, %13 : vector<8x128xf32>
    %cst_11 = arith.constant 0.000000e+00 : f32
    %15 = vector.broadcast %cst_11 : f32 to vector<8x128xf32>
    %16 = arith.maximumf %14, %15 : vector<8x128xf32>
    %c0_12 = arith.constant 0 : index
    %c0_13 = arith.constant 0 : index
    %17 = vector.load %arg6[%c0_12, %c0_13] : memref<1x128xf32, #tpu.memory_space<vmem>>, vector<1x128xf32>
    %18 = vector.broadcast %17 : vector<1x128xf32> to vector<8x128xf32>
    %19 = arith.mulf %16, %18 : vector<8x128xf32>
    %cst_14 = arith.constant dense<0.000000e+00> : vector<8xf32>
    %20 = vector.multi_reduction <add>, %19, %cst_14 [1] : vector<8x128xf32> to vector<8xf32>
    %21 = vector.shape_cast %20 : vector<8xf32> to vector<8x1xf32>
    %c0_15 = arith.constant 0 : index
    %c0_16 = arith.constant 0 : index
    %22 = vector.load %arg7[%c0_15, %c0_16] : memref<1x1xf32, #tpu.memory_space<vmem>>, vector<1x1xf32>
    %23 = vector.broadcast %22 : vector<1x1xf32> to vector<8x1xf32>
    %24 = arith.addf %21, %23 : vector<8x1xf32>
    %c0_17 = arith.constant 0 : index
    %c0_18 = arith.constant 0 : index
    %25 = vector.load %arg8[%c0_17, %c0_18] : memref<8x1xf32, #tpu.memory_space<vmem>>, vector<8x1xf32>
    tpu.vector_store %arg8[%c0_17, %c0_18], %24 {strides = array<i32>} : memref<8x1xf32, #tpu.memory_space<vmem>>, vector<8x1xf32>,
    return
  }
  func.func @transform_0(%arg0: i32) -> (i32, i32) {
    %c0_i32 = arith.constant 0 : i32
    %c0_i32_0 = arith.constant 0 : i32
    return %arg0, %c0_i32 : i32, i32
  }
  func.func @transform_1(%arg0: i32) -> (i32, i32) {
    %c0_i32 = arith.constant 0 : i32
    %c0_i32_0 = arith.constant 0 : i32
    %c0_i32_1 = arith.constant 0 : i32
    return %c0_i32, %c0_i32_0 : i32, i32
  }
  func.func @transform_2(%arg0: i32) -> (i32, i32) {
    %c0_i32 = arith.constant 0 : i32
    %c0_i32_0 = arith.constant 0 : i32
    %c0_i32_1 = arith.constant 0 : i32
    return %c0_i32, %c0_i32_0 : i32, i32
  }
  func.func @transform_3(%arg0: i32) -> (i32, i32) {
    %c0_i32 = arith.constant 0 : i32
    %c0_i32_0 = arith.constant 0 : i32
    %c0_i32_1 = arith.constant 0 : i32
    return %c0_i32, %c0_i32_0 : i32, i32
  }
  func.func @transform_4(%arg0: i32) -> (i32, i32) {
    %c0_i32 = arith.constant 0 : i32
    %c0_i32_0 = arith.constant 0 : i32
    %c0_i32_1 = arith.constant 0 : i32
    return %c0_i32, %c0_i32_0 : i32, i32
  }
  func.func @transform_5(%arg0: i32) -> (i32, i32) {
    %c0_i32 = arith.constant 0 : i32
    %c0_i32_0 = arith.constant 0 : i32
    %c0_i32_1 = arith.constant 0 : i32
    return %c0_i32, %c0_i32_0 : i32, i32
  }
  func.func @transform_6(%arg0: i32) -> (i32, i32) {
    %c0_i32 = arith.constant 0 : i32
    %c0_i32_0 = arith.constant 0 : i32
    %c0_i32_1 = arith.constant 0 : i32
    return %c0_i32, %c0_i32_0 : i32, i32
  }
  func.func @transform_7(%arg0: i32) -> (i32, i32) {
    %c0_i32 = arith.constant 0 : i32
    %c0_i32_0 = arith.constant 0 : i32
    return %arg0, %c0_i32 : i32, i32
  }
}

</mosaic_0001>

<llo_original>
// kernel: tpu_custom_call.1
$region0: #{tpu_custom_call.1}
  #allocation0 [shape = 'u32[]', space=smem, size = 0x4, offset = 0x4, fixed_abs, tag = 'smem constant byte address 0x4 - core index']
  #allocation1 [shape = 'u32[144,128]{1,0:T(1,128)}', space=vmem, size = 0x12000, scoped, tag = 'internal scratch']
  #allocation2 [shape = 'f32[1,1]{1,0:T(1,128)S(1)}', space=vmem, size = 0x200, scoped, tag = 'scoped memory for tpu_custom_call.1']
  %s0 = inlined_call_operand.hbm [shape: f32[8,12], index: 0, kind: input, shape index: {}]
  %s1 = inlined_call_operand.hbm [shape: bf16[12,128], index: 1, kind: input, shape index: {}]
  %s2 = inlined_call_operand.vmem [shape: f32[1,128], index: 2, kind: input, shape index: {}]
  %s3 = inlined_call_operand.hbm [shape: bf16[128,128], index: 3, kind: input, shape index: {}]
  %s4 = inlined_call_operand.vmem [shape: f32[1,128], index: 4, kind: input, shape index: {}]
  %s5 = inlined_call_operand.vmem [shape: f32[1,128], index: 5, kind: input, shape index: {}]
  %s6 = inlined_call_operand.<no memory space> [shape: f32[1,1], index: 6, kind: input, shape index: {}]
  %s7 = inlined_call_operand.vmem [shape: f32[8,1], index: 7, kind: output, shape index: {}]
  %s8 = sld [smem:[#allocation0]]
  $region50: #{tpu_custom_call.1} parent=0
    _
  %s10 = ssub.s32 1, %s8
  %s11 = scalar_select 0, %s10, %s8
  %v12 = vstv %s6
  %13 = vst [vmem:[#allocation2] sm:$0x1] %v12
  $region1: #{tpu_custom_call.1} parent=0
    #allocation3 [shape = 'u8[4096]{0}', space=vmem, size = 0x1000, scoped, tag = 'input window, operand 0, single buffered']
    #allocation4 [shape = 's32[1]{0}', space=sflag, size = 0x4, scoped, tag = 'scoped memory for tpu_custom_call.1']
    #allocation5 [shape = 'u8[4096]{0}', space=vmem, size = 0x1000, scoped, tag = 'input window, operand 1, single buffered']
    #allocation6 [shape = 's32[1]{0}', space=sflag, size = 0x4, scoped, tag = 'scoped memory for tpu_custom_call.1']
    #allocation7 [shape = 'u8[32768]{0}', space=vmem, size = 0x8000, scoped, tag = 'input window, operand 3, single buffered']
    %14 = vsyncpa [#allocation4], 0
    %15 = vsyncpa [#allocation6], 0
    // Predicated region
    $region2: #{tpu_custom_call.1} parent=1 // pred_check
      _
    $region3: #{tpu_custom_call.1} parent=1 // pred_check_branch
      %17 = sbr.rel (0) target = $region5
    $region4: #{tpu_custom_call.1} parent=1 // pred_region
      %s19 = ssub.s32 128, 128
      %20 = vsyncadd [#allocation4], %s19
      %s22 = sshll.u32 [#allocation3], 4
      %s23 = int_to_ptr.vmem [resolvable:$true] %s22
      %25 = dma.hbm_to_vmem [thread:$0]  %s0, 128, %s23, [#allocation4]
    $region5: #{tpu_custom_call.1} parent=1 // pred_fallthru
      _
    // Predicated region
    $region6: #{tpu_custom_call.1} parent=1 // pred_check
      _
    $region7: #{tpu_custom_call.1} parent=1 // pred_check_branch
      %27 = sbr.rel (0) target = $region9
    $region8: #{tpu_custom_call.1} parent=1 // pred_region
      %s29 = ssub.s32 128, 128
      %30 = vsyncadd [#allocation6], %s29
      %s31 = sshll.u32 [#allocation5], 4
      %s32 = int_to_ptr.vmem [resolvable:$true] %s31
      %37 = dma.hbm_to_vmem [thread:$0]  %s1, 128, %s32, [#allocation6], 64, 64, 4
    $region9: #{tpu_custom_call.1} parent=1 // pred_fallthru
      _
    // Predicated region
    $region10: #{tpu_custom_call.1} parent=1 // pred_check
      _
    $region11: #{tpu_custom_call.1} parent=1 // pred_check_branch
      %39 = sbr.rel (0) target = $region13
    $region12: #{tpu_custom_call.1} parent=1 // pred_region
      _
    $region13: #{tpu_custom_call.1} parent=1 // pred_fallthru
      _
    // Predicated region
    $region14: #{tpu_custom_call.1} parent=1 // pred_check
      _
    $region15: #{tpu_custom_call.1} parent=1 // pred_check_branch
      %41 = sbr.rel (0) target = $region17
    $region16: #{tpu_custom_call.1} parent=1 // pred_region
      %s43 = ssub.s32 1024, 1024
      %44 = vsyncadd [#allocation6], %s43
      %s45 = sshll.u32 [#allocation7], 4
      %s46 = int_to_ptr.vmem [resolvable:$true] %s45
      %51 = dma.hbm_to_vmem [thread:$0]  %s3, 1024, %s46, [#allocation6], 64, 64, 4
    $region17: #{tpu_custom_call.1} parent=1 // pred_fallthru
      _
    // Predicated region
    $region18: #{tpu_custom_call.1} parent=1 // pred_check
      _
    $region19: #{tpu_custom_call.1} parent=1 // pred_check_branch
      %53 = sbr.rel (0) target = $region21
    $region20: #{tpu_custom_call.1} parent=1 // pred_region
      _
    $region21: #{tpu_custom_call.1} parent=1 // pred_fallthru
      _
    // Predicated region
    $region22: #{tpu_custom_call.1} parent=1 // pred_check
      _
    $region23: #{tpu_custom_call.1} parent=1 // pred_check_branch
      %55 = sbr.rel (0) target = $region25
    $region24: #{tpu_custom_call.1} parent=1 // pred_region
      _
    $region25: #{tpu_custom_call.1} parent=1 // pred_fallthru
      _
    // Predicated region
    $region26: #{tpu_custom_call.1} parent=1 // pred_check
      _
    $region27: #{tpu_custom_call.1} parent=1 // pred_check_branch
      %57 = sbr.rel (0) target = $region29
    $region28: #{tpu_custom_call.1} parent=1 // pred_region
      _
    $region29: #{tpu_custom_call.1} parent=1 // pred_fallthru
      _
    // Predicated region
    $region30: #{tpu_custom_call.1} parent=1 // pred_check
      _
    $region31: #{tpu_custom_call.1} parent=1 // pred_check_branch
      %59 = sbr.rel (0) target = $region33
    $region32: #{tpu_custom_call.1} parent=1 // pred_region
      %60 = dma.done [#allocation4], 128
    $region33: #{tpu_custom_call.1} parent=1 // pred_fallthru
      _
    // Predicated region
    $region34: #{tpu_custom_call.1} parent=1 // pred_check
      _
    $region35: #{tpu_custom_call.1} parent=1 // pred_check_branch
      %62 = sbr.rel (0) target = $region37
    $region36: #{tpu_custom_call.1} parent=1 // pred_region
      %63 = dma.done [#allocation6], 128
    $region37: #{tpu_custom_call.1} parent=1 // pred_fallthru
      _
    // Predicated region
    $region38: #{tpu_custom_call.1} parent=1 // pred_check
      _
    $region39: #{tpu_custom_call.1} parent=1 // pred_check_branch
      %65 = sbr.rel (0) target = $region41
    $region40: #{tpu_custom_call.1} parent=1 // pred_region
      %66 = dma.done [#allocation6], 1024
    $region41: #{tpu_custom_call.1} parent=1 // pred_fallthru
      _
    %v68 = vld [vmem:[#allocation3] sm:$0xff]
    %v69 = vpack.c.bf16 %v68, %v68
    %v70 = vld [vmem:[#allocation5] sm:$0xf]
    %v71 = vld [vmem:[#allocation5 + $0x4] sm:$0x3]
    %v72 = vld [vmem:[%s2] sm:$0x1]
    %v74 = vlaneseq
    %v75 = vshrl.u32 %v74, 7
    %v76 = vsub.s32 0, %v75
    %v77 = vrot.slane %v72, %v76
    %v81 = vunpack.c.l.b16 %v70
    %v82 = vunpack.c.l.b16 %v71
    %v83 = vpack.c.b16 %v82, %v81
    %vm84 = vcmask 97280
    %v86 = vsel %vm84, %v69, 0
    %vm88 = vcmask 1045504
    %v90 = vsel %vm88, %v83, 0
    %92 = vmatprep.subr.bf16.mxu0 0
    %93 = vmatpush1.bf16.msra.mxu0 0
    %94 = vmatprep.subr.bf16.mxu0 0
    %95 = vmatpush1.bf16.msra.mxu0 0
    %96 = vmatprep.subr.bf16.mxu0 0
    %97 = vmatpush1.bf16.msra.mxu0 0
    %98 = vmatprep.subr.bf16.mxu0 0
    %99 = vmatpush1.bf16.msra.mxu0 0
    %100 = vmatprep.subr.bf16.mxu0 0
    %101 = vmatpush1.bf16.msra.mxu0 0
    %102 = vmatprep.subr.bf16.mxu0 0
    %103 = vmatpush1.bf16.msra.mxu0 0
    %104 = vmatprep.subr.bf16.mxu0 0
    %105 = vmatpush1.bf16.msra.mxu0 0
    %106 = vmatprep.subr.bf16.mxu0 0
    %107 = vmatpush1.bf16.msra.mxu0 %v90
    %108 = vmatprep.subr.bf16.mxu0 0
    %109 = vmatpush2.bf16.msra.mxu0 0
    %110 = vmatprep.subr.bf16.mxu0 0
    %111 = vmatpush2.bf16.msra.mxu0 0
    %112 = vmatprep.subr.bf16.mxu0 0
    %113 = vmatpush2.bf16.msra.mxu0 0
    %114 = vmatprep.subr.bf16.mxu0 0
    %115 = vmatpush2.bf16.msra.mxu0 0
    %116 = vmatprep.subr.bf16.mxu0 0
    %117 = vmatpush2.bf16.msra.mxu0 0
    %118 = vmatprep.subr.bf16.mxu0 0
    %119 = vmatpush2.bf16.msra.mxu0 0
    %120 = vmatprep.subr.bf16.mxu0 0
    %121 = vmatpush2.bf16.msra.mxu0 0
    %122 = vmatprep.subr.bf16.mxu0 0
    %123 = vmatpush2.bf16.msra.mxu0 0
    %124 = vmatprep.mubr.bf16.mxu0 0
    %125 = vmatmul.mubr.bf16.gmra.mxu0 %v86
    %v126 = vpop.f32.mrf.mxu0
    %v127 = vadd.f32 %v77, %v126
    %v128 = vpop.f32.mrf.mxu0
    %v129 = vpop.f32.mrf.mxu0
    %v130 = vpop.f32.mrf.mxu0
    %131 = vdwg.mxu0
    %v132 = vmax.f32 %v127, 0.0
    %v133 = vpack.c.bf16 %v132, %v132
    %v134 = vld [vmem:[#allocation7] sm:$0xf]
    %v135 = vld [vmem:[#allocation7 + $0x4] sm:$0xf]
    %v136 = vld [vmem:[#allocation7 + $0x8] sm:$0xf]
    %v137 = vld [vmem:[#allocation7 + $0xc] sm:$0xf]
    %v138 = vld [vmem:[#allocation7 + $0x10] sm:$0xf]
    %v139 = vld [vmem:[#allocation7 + $0x14] sm:$0xf]
    %v140 = vld [vmem:[#allocation7 + $0x18] sm:$0xf]
    %v141 = vld [vmem:[#allocation7 + $0x1c] sm:$0xf]
    %v142 = vld [vmem:[#allocation7 + $0x20] sm:$0xf]
    %v143 = vld [vmem:[#allocation7 + $0x24] sm:$0xf]
    %v144 = vld [vmem:[#allocation7 + $0x28] sm:$0xf]
    %v145 = vld [vmem:[#allocation7 + $0x2c] sm:$0xf]
    %v146 = vld [vmem:[#allocation7 + $0x30] sm:$0xf]
    %v147 = vld [vmem:[#allocation7 + $0x34] sm:$0xf]
    %v148 = vld [vmem:[#allocation7 + $0x38] sm:$0xf]
    %v149 = vld [vmem:[#allocation7 + $0x3c] sm:$0xf]
    %v150 = vld [vmem:[%s4] sm:$0x1]
    %v152 = vlaneseq
    %v153 = vshrl.u32 %v152, 7
    %v154 = vsub.s32 0, %v153
    %v155 = vrot.slane %v150, %v154
    %v173 = vunpack.c.l.b16 %v134
    %v174 = vunpack.c.l.b16 %v135
    %v175 = vunpack.c.l.b16 %v136
    %v176 = vunpack.c.l.b16 %v137
    %v177 = vunpack.c.l.b16 %v138
    %v178 = vunpack.c.l.b16 %v139
    %v179 = vunpack.c.l.b16 %v140
    %v180 = vunpack.c.l.b16 %v141
    %v181 = vunpack.c.l.b16 %v142
    %v182 = vunpack.c.l.b16 %v143
    %v183 = vunpack.c.l.b16 %v144
    %v184 = vunpack.c.l.b16 %v145
    %v185 = vunpack.c.l.b16 %v146
    %v186 = vunpack.c.l.b16 %v147
    %v187 = vunpack.c.l.b16 %v148
    %v188 = vunpack.c.l.b16 %v149
    %v189 = vpack.c.b16 %v174, %v173
    %v190 = vpack.c.b16 %v176, %v175
    %v191 = vpack.c.b16 %v178, %v177
    %v192 = vpack.c.b16 %v180, %v179
    %v193 = vpack.c.b16 %v182, %v181
    %v194 = vpack.c.b16 %v184, %v183
    %v195 = vpack.c.b16 %v186, %v185
    %v196 = vpack.c.b16 %v188, %v187
    %205 = vmatprep.subr.bf16.mxu0 0
    %206 = vmatpush1.bf16.msra.mxu0 %v196
    %207 = vmatprep.subr.bf16.mxu0 0
    %208 = vmatpush1.bf16.msra.mxu0 %v195
    %209 = vmatprep.subr.bf16.mxu0 0
    %210 = vmatpush1.bf16.msra.mxu0 %v194
    %211 = vmatprep.subr.bf16.mxu0 0
    %212 = vmatpush1.bf16.msra.mxu0 %v193
    %213 = vmatprep.subr.bf16.mxu0 0
    %214 = vmatpush1.bf16.msra.mxu0 %v192
    %215 = vmatprep.subr.bf16.mxu0 0
    %216 = vmatpush1.bf16.msra.mxu0 %v191
    %217 = vmatprep.subr.bf16.mxu0 0
    %218 = vmatpush1.bf16.msra.mxu0 %v190
    %219 = vmatprep.subr.bf16.mxu0 0
    %220 = vmatpush1.bf16.msra.mxu0 %v189
    %221 = vmatprep.subr.bf16.mxu0 0
    %222 = vmatpush2.bf16.msra.mxu0 0
    %223 = vmatprep.subr.bf16.mxu0 0
    %224 = vmatpush2.bf16.msra.mxu0 0
    %225 = vmatprep.subr.bf16.mxu0 0
    %226 = vmatpush2.bf16.msra.mxu0 0
    %227 = vmatprep.subr.bf16.mxu0 0
    %228 = vmatpush2.bf16.msra.mxu0 0
    %229 = vmatprep.subr.bf16.mxu0 0
    %230 = vmatpush2.bf16.msra.mxu0 0
    %231 = vmatprep.subr.bf16.mxu0 0
    %232 = vmatpush2.bf16.msra.mxu0 0
    %233 = vmatprep.subr.bf16.mxu0 0
    %234 = vmatpush2.bf16.msra.mxu0 0
    %235 = vmatprep.subr.bf16.mxu0 0
    %236 = vmatpush2.bf16.msra.mxu0 0
    %237 = vmatprep.mubr.bf16.mxu0 0
    %238 = vmatmul.mubr.bf16.gmra.mxu0 %v133
    %v239 = vpop.f32.mrf.mxu0
    %v240 = vadd.f32 %v155, %v239
    %v241 = vpop.f32.mrf.mxu0
    %v242 = vpop.f32.mrf.mxu0
    %v243 = vpop.f32.mrf.mxu0
    %244 = vdwg.mxu0
    %v245 = vmax.f32 %v240, 0.0
    %v246 = vld [vmem:[%s5] sm:$0x1]
    %v248 = vlaneseq
    %v249 = vshrl.u32 %v248, 7
    %v250 = vsub.s32 0, %v249
    %v251 = vrot.slane %v246, %v250
    %v253 = vmul.f32 %v245, %v251
    %254 = vadd.xlane.f32.xlu0 %v253
    %v255 = vpop.xlane.xlu0 %254
    %v256 = vld [vmem:[#allocation2] sm:$0x1]
    %v258 = vlaneseq
    %v259 = vshrl.u32 %v258, 7
    %v260 = vsub.s32 0, %v259
    %v261 = vrot.slane %v256, %v260
    %v263 = vadd.f32 %v255, %v261
    %vm264 = vcmask 7168
    %265 = vst.msk [vmem:[%s7] sm:$0xff] %vm264, %v263
    // Predicated region
    $region42: #{tpu_custom_call.1} parent=1 // pred_check
      _
    $region43: #{tpu_custom_call.1} parent=1 // pred_check_branch
      %267 = sbr.rel (0) target = $region45
    $region44: #{tpu_custom_call.1} parent=1 // pred_region
      _
    $region45: #{tpu_custom_call.1} parent=1 // pred_fallthru
      _
    // Predicated region
    $region46: #{tpu_custom_call.1} parent=1 // pred_check
      _
    $region47: #{tpu_custom_call.1} parent=1 // pred_check_branch
      %269 = sbr.rel (0) target = $region49
    $region48: #{tpu_custom_call.1} parent=1 // pred_region
      _
    $region49: #{tpu_custom_call.1} parent=1 // pred_fallthru
      _
    %270 = vsyncpa [#allocation4], 1
    %271 = vsyncpa [#allocation6], 1

</llo_original>
